<compile_context>
chip_gen: v7x
topology: tpu7x:2x2x1
jax: 0.10.0
libtpu: 0.0.40
codegen_flags: <defaults>
</compile_context>

<pallas_src>
import jax
import jax.numpy as jnp
from jax import lax
from jax.experimental import pallas as pl
from jax.experimental.pallas import tpu as pltpu


# ---------------------------------------------------------------------------
# Pallas kernel: fused bidirectional LSTM recurrence (both directions / step).
#
#   gx_ref  : (T, B, 8H)  precomputed input projections + biases.  Columns are
#             laid out (gate, direction, unit) with gate order [i, f, o, g];
#             the backward-direction columns are already time-reversed, so
#             loop step s only reads row s.
#   whh_ref : (2H, 8H)    block-diagonal hidden->gates weight.  Rows are
#             [h_fwd (H), h_bwd (H)]; columns match gx.
#   out_ref : (T, B, 2H)  out[s, :, :H] = fwd hidden at time s,
#             out[s, :, H:] = bwd hidden at time T-1-s (wrapper un-reverses).
# ---------------------------------------------------------------------------
def _bilstm_recurrence_kernel(gx_ref, whh_ref, out_ref):
    T, B, _ = gx_ref.shape
    H2 = whh_ref.shape[0]          # 2H
    H = H2 // 2
    whh = whh_ref[...]             # hoist the weight load out of the loop

    def step(s, carry):
        h, c = carry               # (B, 2H) each; fwd in [:, :H], bwd in [:, H:]
        # One fused MXU issue per timestep for both directions.
        gates = gx_ref[s] + jnp.dot(h, whh, preferred_element_type=jnp.float32)
        sig = jax.nn.sigmoid(gates[:, :6 * H])      # one sigmoid covers i, f, o
        i = sig[:, 0 * H:2 * H]                     # [i_f, i_b]
        f = sig[:, 2 * H:4 * H]                     # [f_f, f_b]
        o = sig[:, 4 * H:6 * H]                     # [o_f, o_b]
        g = jnp.tanh(gates[:, 6 * H:])              # one tanh covers [g_f, g_b]
        c = f * c + i * g
        h = o * jnp.tanh(c)
        out_ref[s] = h                              # single dense row store
        return h, c

    h0 = jnp.zeros((B, H2), jnp.float32)
    c0 = jnp.zeros((B, H2), jnp.float32)
    # Fully unrolled short loop: lets the scheduler interleave the two
    # independent (fwd / bwd) dependency chains.
    lax.fori_loop(0, T, step, (h0, c0), unroll=True)


# ---------------------------------------------------------------------------
# One bidirectional LSTM layer, time-major: (T, B, D) -> (T, B, 2H)
# ---------------------------------------------------------------------------
def _bilstm_layer(x_tm, wih_fused, b_fused, whh_fused):
    T, B, D = x_tm.shape
    G = wih_fused.shape[1]         # 8H
    H = G // 8

    # Input projection hoisted out of the recurrence: one big matmul.
    gx = (x_tm.reshape(T * B, D) @ wih_fused + b_fused).reshape(T, B, 4, 2, H)
    # Backward direction consumes time in reverse: pre-flip its columns so the
    # kernel reads exactly one contiguous row per step.
    gx = jnp.concatenate(
        [gx[:, :, :, :1, :], jnp.flip(gx[:, :, :, 1:, :], axis=0)], axis=3)
    gx = gx.reshape(T, B, G).astype(jnp.float32)

    out = pl.pallas_call(
        _bilstm_recurrence_kernel,
        out_shape=jax.ShapeDtypeStruct((T, B, 2 * H), jnp.float32),
        in_specs=[pl.BlockSpec(memory_space=pltpu.MemorySpace.VMEM)] * 2,
        out_specs=pl.BlockSpec(memory_space=pltpu.MemorySpace.VMEM),
        compiler_params=pltpu.CompilerParams(vmem_limit_bytes=64 * 1024 * 1024),
    )(gx, whh_fused)

    # Un-reverse the backward half (kernel stored bwd hidden of time t at row T-1-t).
    return jnp.concatenate([out[:, :, :H], jnp.flip(out[:, :, H:], axis=0)],
                           axis=-1)


# ---------------------------------------------------------------------------
# One-time parameter packing (gate reorder [i,f,g,o]->[i,f,o,g], transpose,
# direction fusion). Done once outside jit so it is not re-traced per call.
# ---------------------------------------------------------------------------
def _pack_direction(w_ih, w_hh, b_ih, b_hh, H):
    D = w_ih.shape[1]
    perm = jnp.array([0, 1, 3, 2])                   # [i,f,g,o] -> [i,f,o,g]
    w_ih_g = w_ih.reshape(4, H, D)[perm]             # (4, H, D)  (gate, out, in)
    w_hh_g = w_hh.reshape(4, H, H)[perm]             # (4, H, H)
    b_g = (b_ih + b_hh).reshape(4, H)[perm]          # (4, H)
    return (jnp.transpose(w_ih_g, (2, 0, 1)),        # (D, 4, H)  (in, gate, out)
            jnp.transpose(w_hh_g, (2, 0, 1)),        # (H, 4, H)
            b_g)


def pack_lstm_params(params):
    packed = []
    for (fw, bw) in params:
        H = fw[1].shape[1]
        wihf, whhf, bf = _pack_direction(*fw, H)
        wihb, whhb, bb = _pack_direction(*bw, H)
        D = wihf.shape[0]
        # Fused input weight (D, 8H): columns (gate, direction, unit).
        wih_fused = jnp.stack([wihf, wihb], axis=2).reshape(D, 8 * H)
        b_fused = jnp.stack([bf, bb], axis=1).reshape(8 * H)
        # Block-diagonal fused hidden weight (2H, 8H).
        whh_fused = jnp.zeros((2, H, 4, 2, H), jnp.float32)
        whh_fused = whh_fused.at[0, :, :, 0, :].set(whhf)
        whh_fused = whh_fused.at[1, :, :, 1, :].set(whhb)
        whh_fused = whh_fused.reshape(2 * H, 8 * H)
        packed.append((wih_fused, b_fused, whh_fused))
    return tuple(packed)


# ---------------------------------------------------------------------------
# SequenceDecoder forward: x (B, T, 2*seqnhidden2) -> (B, T, 2*seqnhidden1)
# ---------------------------------------------------------------------------
@jax.jit
def sequence_decoder_forward(x, packed_params):
    x_tm = jnp.transpose(x, (1, 0, 2)).astype(jnp.float32)   # (T, B, D)
    for (wih_fused, b_fused, whh_fused) in packed_params:
        x_tm = _bilstm_layer(x_tm, wih_fused, b_fused, whh_fused)
    return jnp.transpose(x_tm, (1, 0, 2))                     # (B, T, 2H)


# ---------------------------------------------------------------------------
# Parameter setup (deterministic, PyTorch-style uniform(-1/sqrt(H), 1/sqrt(H)))
# ---------------------------------------------------------------------------
def init_lstm_params(key, input_size, hidden_size, num_layers):
    k = 1.0 / jnp.sqrt(hidden_size)
    layers = []
    for layer in range(num_layers):
        d_in = input_size if layer == 0 else 2 * hidden_size
        dir_params = []
        for _ in range(2):  # forward, backward
            key, k1, k2, k3, k4 = jax.random.split(key, 5)
            w_ih = jax.random.uniform(k1, (4 * hidden_size, d_in), jnp.float32, -k, k)
            w_hh = jax.random.uniform(k2, (4 * hidden_size, hidden_size), jnp.float32, -k, k)
            b_ih = jax.random.uniform(k3, (4 * hidden_size,), jnp.float32, -k, k)
            b_hh = jax.random.uniform(k4, (4 * hidden_size,), jnp.float32, -k, k)
            dir_params.append((w_ih, w_hh, b_ih, b_hh))
        layers.append(tuple(dir_params))
    return layers


# ---------------------------------------------------------------------------
# Pure-JAX reference (mirrors PyTorch bidirectional LSTM semantics)
# ---------------------------------------------------------------------------
def _ref_cell(x_t, h, c, w_ih, w_hh, b_ih, b_hh):
    H = h.shape[1]
    gates = x_t @ w_ih.T + h @ w_hh.T + b_ih + b_hh
    i = jax.nn.sigmoid(gates[:, 0 * H:1 * H])
    f = jax.nn.sigmoid(gates[:, 1 * H:2 * H])
    g = jnp.tanh(gates[:, 2 * H:3 * H])
    o = jax.nn.sigmoid(gates[:, 3 * H:4 * H])
    c_new = f * c + i * g
    return o * jnp.tanh(c_new), c_new


def sequence_decoder_reference(x, params):
    B, T, _ = x.shape
    out = x.astype(jnp.float32)
    for (fw, bw) in params:
        H = fw[1].shape[1]
        h = jnp.zeros((B, H), jnp.float32)
        c = jnp.zeros((B, H), jnp.float32)
        fwd = []
        for t in range(T):
            h, c = _ref_cell(out[:, t], h, c, *fw)
            fwd.append(h)
        h = jnp.zeros((B, H), jnp.float32)
        c = jnp.zeros((B, H), jnp.float32)
        bwd = [None] * T
        for t in range(T - 1, -1, -1):
            h, c = _ref_cell(out[:, t], h, c, *bw)
            bwd[t] = h
        out = jnp.concatenate(
            [jnp.stack(fwd, axis=1), jnp.stack(bwd, axis=1)], axis=-1)
    return out


if __name__ == "__main__":
    config = {"seqnhidden1": 32, "seqnhidden2": 16, "seqnlayer2": 1}
    B, T = 2, 8
    D_in = config["seqnhidden2"] * 2          # LSTM input size = 32
    H = config["seqnhidden1"]                 # hidden size = 32

    key = jax.random.PRNGKey(0)
    key, kx, kp = jax.random.split(key, 3)
    x = jax.random.normal(kx, (B, T, D_in), jnp.float32)
    params = init_lstm_params(kp, D_in, H, config["seqnlayer2"])
    params = tuple(tuple(layer) for layer in params)
    packed = pack_lstm_params(params)

    y = sequence_decoder_forward(x, packed)
    y = jax.block_until_ready(y)

    assert y.shape == (B, T, 2 * H), y.shape

    y_ref = sequence_decoder_reference(x, params)
    err = float(jnp.max(jnp.abs(y - y_ref)))
    assert err < 1e-4, f"max abs error {err}"

    print("KERNEL_OK")
</pallas_src>

<mosaic_0001>
module attributes {stable_mosaic.version = 11 : i64} {
  func.func @_bilstm_recurrence_kernel(%arg0: memref<8x2x256xf32, #tpu.memory_space<vmem>>, %arg1: memref<64x256xf32, #tpu.memory_space<vmem>>, %arg2: memref<8x2x64xf32, #tpu.memory_space<vmem>>) attributes {dimension_semantics = [], scalar_prefetch = 0 : i64, scratch_operands = 0 : i64, tpu.core_type = #tpu.core_type<tc>} {
    %c0 = arith.constant 0 : index
    %c0_0 = arith.constant 0 : index
    %0 = vector.load %arg1[%c0, %c0_0] : memref<64x256xf32, #tpu.memory_space<vmem>>, vector<64x256xf32>
    %cst = arith.constant 0.000000e+00 : f32
    %1 = vector.broadcast %cst : f32 to vector<2x64xf32>
    %cst_1 = arith.constant 0.000000e+00 : f32
    %2 = vector.broadcast %cst_1 : f32 to vector<2x64xf32>
    %c0_i32 = arith.constant 0 : i32
    %3 = arith.index_cast %c0_i32 : i32 to index
    %c0_2 = arith.constant 0 : index
    %c0_3 = arith.constant 0 : index
    %4 = vector.load %arg0[%3, %c0_2, %c0_3] : memref<8x2x256xf32, #tpu.memory_space<vmem>>, vector<1x2x256xf32>
    %5 = vector.shape_cast %4 : vector<1x2x256xf32> to vector<2x256xf32>
    %cst_4 = arith.constant dense<0.000000e+00> : vector<2x256xf32>
    %6 = tpu.matmul %1, %0, %cst_4 {dimension_numbers = #tpu.dot_dimension_numbers<[1], [0], [0], [1], [0, 0, 1, 1], [], []>} : vector<2x64xf32>, vector<64x256xf32>, vector<2x256xf32> -> vector<2x256xf32>
    %7 = arith.addf %5, %6 : vector<2x256xf32>
    %8 = vector.extract_strided_slice %7 {offsets = [0, 0], sizes = [2, 192], strides = [1, 1]} : vector<2x256xf32> to vector<2x192xf32>
    %9 = arith.negf %8 : vector<2x192xf32>
    %10 = math.exp %9 : vector<2x192xf32>
    %cst_5 = arith.constant 1.000000e+00 : f32
    %11 = vector.broadcast %cst_5 : f32 to vector<2x192xf32>
    %12 = arith.addf %11, %10 : vector<2x192xf32>
    %13 = arith.divf %11, %12 : vector<2x192xf32>
    %14 = vector.extract_strided_slice %13 {offsets = [0, 0], sizes = [2, 64], strides = [1, 1]} : vector<2x192xf32> to vector<2x64xf32>
    %15 = vector.extract_strided_slice %13 {offsets = [0, 64], sizes = [2, 64], strides = [1, 1]} : vector<2x192xf32> to vector<2x64xf32>
    %16 = vector.extract_strided_slice %13 {offsets = [0, 128], sizes = [2, 64], strides = [1, 1]} : vector<2x192xf32> to vector<2x64xf32>
    %17 = vector.extract_strided_slice %7 {offsets = [0, 192], sizes = [2, 64], strides = [1, 1]} : vector<2x256xf32> to vector<2x64xf32>
    %18 = math.tanh %17 : vector<2x64xf32>
    %19 = arith.mulf %15, %2 : vector<2x64xf32>
    %20 = arith.mulf %14, %18 : vector<2x64xf32>
    %21 = arith.addf %19, %20 : vector<2x64xf32>
    %22 = math.tanh %21 : vector<2x64xf32>
    %23 = arith.mulf %16, %22 : vector<2x64xf32>
    %24 = arith.index_cast %c0_i32 : i32 to index
    %c0_6 = arith.constant 0 : index
    %c0_7 = arith.constant 0 : index
    %25 = vector.load %arg2[%24, %c0_6, %c0_7] : memref<8x2x64xf32, #tpu.memory_space<vmem>>, vector<1x2x64xf32>
    %26 = vector.shape_cast %25 : vector<1x2x64xf32> to vector<2x64xf32>
    %27 = vector.shape_cast %23 : vector<2x64xf32> to vector<1x2x64xf32>
    tpu.vector_store %arg2[%24, %c0_6, %c0_7], %27 {strides = array<i32>} : memref<8x2x64xf32, #tpu.memory_space<vmem>>, vector<1x2x64xf32>,
    %c1_i32 = arith.constant 1 : i32
    %28 = arith.index_cast %c1_i32 : i32 to index
    %c0_8 = arith.constant 0 : index
    %c0_9 = arith.constant 0 : index
    %29 = vector.load %arg0[%28, %c0_8, %c0_9] : memref<8x2x256xf32, #tpu.memory_space<vmem>>, vector<1x2x256xf32>
    %30 = vector.shape_cast %29 : vector<1x2x256xf32> to vector<2x256xf32>
    %cst_10 = arith.constant dense<0.000000e+00> : vector<2x256xf32>
    %31 = tpu.matmul %23, %0, %cst_10 {dimension_numbers = #tpu.dot_dimension_numbers<[1], [0], [0], [1], [0, 0, 1, 1], [], []>} : vector<2x64xf32>, vector<64x256xf32>, vector<2x256xf32> -> vector<2x256xf32>
    %32 = arith.addf %30, %31 : vector<2x256xf32>
    %33 = vector.extract_strided_slice %32 {offsets = [0, 0], sizes = [2, 192], strides = [1, 1]} : vector<2x256xf32> to vector<2x192xf32>
    %34 = arith.negf %33 : vector<2x192xf32>
    %35 = math.exp %34 : vector<2x192xf32>
    %cst_11 = arith.constant 1.000000e+00 : f32
    %36 = vector.broadcast %cst_11 : f32 to vector<2x192xf32>
    %37 = arith.addf %36, %35 : vector<2x192xf32>
    %38 = arith.divf %36, %37 : vector<2x192xf32>
    %39 = vector.extract_strided_slice %38 {offsets = [0, 0], sizes = [2, 64], strides = [1, 1]} : vector<2x192xf32> to vector<2x64xf32>
    %40 = vector.extract_strided_slice %38 {offsets = [0, 64], sizes = [2, 64], strides = [1, 1]} : vector<2x192xf32> to vector<2x64xf32>
    %41 = vector.extract_strided_slice %38 {offsets = [0, 128], sizes = [2, 64], strides = [1, 1]} : vector<2x192xf32> to vector<2x64xf32>
    %42 = vector.extract_strided_slice %32 {offsets = [0, 192], sizes = [2, 64], strides = [1, 1]} : vector<2x256xf32> to vector<2x64xf32>
    %43 = math.tanh %42 : vector<2x64xf32>
    %44 = arith.mulf %40, %21 : vector<2x64xf32>
    %45 = arith.mulf %39, %43 : vector<2x64xf32>
    %46 = arith.addf %44, %45 : vector<2x64xf32>
    %47 = math.tanh %46 : vector<2x64xf32>
    %48 = arith.mulf %41, %47 : vector<2x64xf32>
    %49 = arith.index_cast %c1_i32 : i32 to index
    %c0_12 = arith.constant 0 : index
    %c0_13 = arith.constant 0 : index
    %50 = vector.load %arg2[%49, %c0_12, %c0_13] : memref<8x2x64xf32, #tpu.memory_space<vmem>>, vector<1x2x64xf32>
    %51 = vector.shape_cast %50 : vector<1x2x64xf32> to vector<2x64xf32>
    %52 = vector.shape_cast %48 : vector<2x64xf32> to vector<1x2x64xf32>
    tpu.vector_store %arg2[%49, %c0_12, %c0_13], %52 {strides = array<i32>} : memref<8x2x64xf32, #tpu.memory_space<vmem>>, vector<1x2x64xf32>,
    %c2_i32 = arith.constant 2 : i32
    %53 = arith.index_cast %c2_i32 : i32 to index
    %c0_14 = arith.constant 0 : index
    %c0_15 = arith.constant 0 : index
    %54 = vector.load %arg0[%53, %c0_14, %c0_15] : memref<8x2x256xf32, #tpu.memory_space<vmem>>, vector<1x2x256xf32>
    %55 = vector.shape_cast %54 : vector<1x2x256xf32> to vector<2x256xf32>
    %cst_16 = arith.constant dense<0.000000e+00> : vector<2x256xf32>
    %56 = tpu.matmul %48, %0, %cst_16 {dimension_numbers = #tpu.dot_dimension_numbers<[1], [0], [0], [1], [0, 0, 1, 1], [], []>} : vector<2x64xf32>, vector<64x256xf32>, vector<2x256xf32> -> vector<2x256xf32>
    %57 = arith.addf %55, %56 : vector<2x256xf32>
    %58 = vector.extract_strided_slice %57 {offsets = [0, 0], sizes = [2, 192], strides = [1, 1]} : vector<2x256xf32> to vector<2x192xf32>
    %59 = arith.negf %58 : vector<2x192xf32>
    %60 = math.exp %59 : vector<2x192xf32>
    %cst_17 = arith.constant 1.000000e+00 : f32
    %61 = vector.broadcast %cst_17 : f32 to vector<2x192xf32>
    %62 = arith.addf %61, %60 : vector<2x192xf32>
    %63 = arith.divf %61, %62 : vector<2x192xf32>
    %64 = vector.extract_strided_slice %63 {offsets = [0, 0], sizes = [2, 64], strides = [1, 1]} : vector<2x192xf32> to vector<2x64xf32>
    %65 = vector.extract_strided_slice %63 {offsets = [0, 64], sizes = [2, 64], strides = [1, 1]} : vector<2x192xf32> to vector<2x64xf32>
    %66 = vector.extract_strided_slice %63 {offsets = [0, 128], sizes = [2, 64], strides = [1, 1]} : vector<2x192xf32> to vector<2x64xf32>
    %67 = vector.extract_strided_slice %57 {offsets = [0, 192], sizes = [2, 64], strides = [1, 1]} : vector<2x256xf32> to vector<2x64xf32>
    %68 = math.tanh %67 : vector<2x64xf32>
    %69 = arith.mulf %65, %46 : vector<2x64xf32>
    %70 = arith.mulf %64, %68 : vector<2x64xf32>
    %71 = arith.addf %69, %70 : vector<2x64xf32>
    %72 = math.tanh %71 : vector<2x64xf32>
    %73 = arith.mulf %66, %72 : vector<2x64xf32>
    %74 = arith.index_cast %c2_i32 : i32 to index
    %c0_18 = arith.constant 0 : index
    %c0_19 = arith.constant 0 : index
    %75 = vector.load %arg2[%74, %c0_18, %c0_19] : memref<8x2x64xf32, #tpu.memory_space<vmem>>, vector<1x2x64xf32>
    %76 = vector.shape_cast %75 : vector<1x2x64xf32> to vector<2x64xf32>
    %77 = vector.shape_cast %73 : vector<2x64xf32> to vector<1x2x64xf32>
    tpu.vector_store %arg2[%74, %c0_18, %c0_19], %77 {strides = array<i32>} : memref<8x2x64xf32, #tpu.memory_space<vmem>>, vector<1x2x64xf32>,
    %c3_i32 = arith.constant 3 : i32
    %78 = arith.index_cast %c3_i32 : i32 to index
    %c0_20 = arith.constant 0 : index
    %c0_21 = arith.constant 0 : index
    %79 = vector.load %arg0[%78, %c0_20, %c0_21] : memref<8x2x256xf32, #tpu.memory_space<vmem>>, vector<1x2x256xf32>
    %80 = vector.shape_cast %79 : vector<1x2x256xf32> to vector<2x256xf32>
    %cst_22 = arith.constant dense<0.000000e+00> : vector<2x256xf32>
    %81 = tpu.matmul %73, %0, %cst_22 {dimension_numbers = #tpu.dot_dimension_numbers<[1], [0], [0], [1], [0, 0, 1, 1], [], []>} : vector<2x64xf32>, vector<64x256xf32>, vector<2x256xf32> -> vector<2x256xf32>
    %82 = arith.addf %80, %81 : vector<2x256xf32>
    %83 = vector.extract_strided_slice %82 {offsets = [0, 0], sizes = [2, 192], strides = [1, 1]} : vector<2x256xf32> to vector<2x192xf32>
    %84 = arith.negf %83 : vector<2x192xf32>
    %85 = math.exp %84 : vector<2x192xf32>
    %cst_23 = arith.constant 1.000000e+00 : f32
    %86 = vector.broadcast %cst_23 : f32 to vector<2x192xf32>
    %87 = arith.addf %86, %85 : vector<2x192xf32>
    %88 = arith.divf %86, %87 : vector<2x192xf32>
    %89 = vector.extract_strided_slice %88 {offsets = [0, 0], sizes = [2, 64], strides = [1, 1]} : vector<2x192xf32> to vector<2x64xf32>
    %90 = vector.extract_strided_slice %88 {offsets = [0, 64], sizes = [2, 64], strides = [1, 1]} : vector<2x192xf32> to vector<2x64xf32>
    %91 = vector.extract_strided_slice %88 {offsets = [0, 128], sizes = [2, 64], strides = [1, 1]} : vector<2x192xf32> to vector<2x64xf32>
    %92 = vector.extract_strided_slice %82 {offsets = [0, 192], sizes = [2, 64], strides = [1, 1]} : vector<2x256xf32> to vector<2x64xf32>
    %93 = math.tanh %92 : vector<2x64xf32>
    %94 = arith.mulf %90, %71 : vector<2x64xf32>
    %95 = arith.mulf %89, %93 : vector<2x64xf32>
    %96 = arith.addf %94, %95 : vector<2x64xf32>
    %97 = math.tanh %96 : vector<2x64xf32>
    %98 = arith.mulf %91, %97 : vector<2x64xf32>
    %99 = arith.index_cast %c3_i32 : i32 to index
    %c0_24 = arith.constant 0 : index
    %c0_25 = arith.constant 0 : index
    %100 = vector.load %arg2[%99, %c0_24, %c0_25] : memref<8x2x64xf32, #tpu.memory_space<vmem>>, vector<1x2x64xf32>
    %101 = vector.shape_cast %100 : vector<1x2x64xf32> to vector<2x64xf32>
    %102 = vector.shape_cast %98 : vector<2x64xf32> to vector<1x2x64xf32>
    tpu.vector_store %arg2[%99, %c0_24, %c0_25], %102 {strides = array<i32>} : memref<8x2x64xf32, #tpu.memory_space<vmem>>, vector<1x2x64xf32>,
    %c4_i32 = arith.constant 4 : i32
    %103 = arith.index_cast %c4_i32 : i32 to index
    %c0_26 = arith.constant 0 : index
    %c0_27 = arith.constant 0 : index
    %104 = vector.load %arg0[%103, %c0_26, %c0_27] : memref<8x2x256xf32, #tpu.memory_space<vmem>>, vector<1x2x256xf32>
    %105 = vector.shape_cast %104 : vector<1x2x256xf32> to vector<2x256xf32>
    %cst_28 = arith.constant dense<0.000000e+00> : vector<2x256xf32>
    %106 = tpu.matmul %98, %0, %cst_28 {dimension_numbers = #tpu.dot_dimension_numbers<[1], [0], [0], [1], [0, 0, 1, 1], [], []>} : vector<2x64xf32>, vector<64x256xf32>, vector<2x256xf32> -> vector<2x256xf32>
    %107 = arith.addf %105, %106 : vector<2x256xf32>
    %108 = vector.extract_strided_slice %107 {offsets = [0, 0], sizes = [2, 192], strides = [1, 1]} : vector<2x256xf32> to vector<2x192xf32>
    %109 = arith.negf %108 : vector<2x192xf32>
    %110 = math.exp %109 : vector<2x192xf32>
    %cst_29 = arith.constant 1.000000e+00 : f32
    %111 = vector.broadcast %cst_29 : f32 to vector<2x192xf32>
    %112 = arith.addf %111, %110 : vector<2x192xf32>
    %113 = arith.divf %111, %112 : vector<2x192xf32>
    %114 = vector.extract_strided_slice %113 {offsets = [0, 0], sizes = [2, 64], strides = [1, 1]} : vector<2x192xf32> to vector<2x64xf32>
    %115 = vector.extract_strided_slice %113 {offsets = [0, 64], sizes = [2, 64], strides = [1, 1]} : vector<2x192xf32> to vector<2x64xf32>
    %116 = vector.extract_strided_slice %113 {offsets = [0, 128], sizes = [2, 64], strides = [1, 1]} : vector<2x192xf32> to vector<2x64xf32>
    %117 = vector.extract_strided_slice %107 {offsets = [0, 192], sizes = [2, 64], strides = [1, 1]} : vector<2x256xf32> to vector<2x64xf32>
    %118 = math.tanh %117 : vector<2x64xf32>
    %119 = arith.mulf %115, %96 : vector<2x64xf32>
    %120 = arith.mulf %114, %118 : vector<2x64xf32>
    %121 = arith.addf %119, %120 : vector<2x64xf32>
    %122 = math.tanh %121 : vector<2x64xf32>
    %123 = arith.mulf %116, %122 : vector<2x64xf32>
    %124 = arith.index_cast %c4_i32 : i32 to index
    %c0_30 = arith.constant 0 : index
    %c0_31 = arith.constant 0 : index
    %125 = vector.load %arg2[%124, %c0_30, %c0_31] : memref<8x2x64xf32, #tpu.memory_space<vmem>>, vector<1x2x64xf32>
    %126 = vector.shape_cast %125 : vector<1x2x64xf32> to vector<2x64xf32>
    %127 = vector.shape_cast %123 : vector<2x64xf32> to vector<1x2x64xf32>
    tpu.vector_store %arg2[%124, %c0_30, %c0_31], %127 {strides = array<i32>} : memref<8x2x64xf32, #tpu.memory_space<vmem>>, vector<1x2x64xf32>,
    %c5_i32 = arith.constant 5 : i32
    %128 = arith.index_cast %c5_i32 : i32 to index
    %c0_32 = arith.constant 0 : index
    %c0_33 = arith.constant 0 : index
    %129 = vector.load %arg0[%128, %c0_32, %c0_33] : memref<8x2x256xf32, #tpu.memory_space<vmem>>, vector<1x2x256xf32>
    %130 = vector.shape_cast %129 : vector<1x2x256xf32> to vector<2x256xf32>
    %cst_34 = arith.constant dense<0.000000e+00> : vector<2x256xf32>
    %131 = tpu.matmul %123, %0, %cst_34 {dimension_numbers = #tpu.dot_dimension_numbers<[1], [0], [0], [1], [0, 0, 1, 1], [], []>} : vector<2x64xf32>, vector<64x256xf32>, vector<2x256xf32> -> vector<2x256xf32>
    %132 = arith.addf %130, %131 : vector<2x256xf32>
    %133 = vector.extract_strided_slice %132 {offsets = [0, 0], sizes = [2, 192], strides = [1, 1]} : vector<2x256xf32> to vector<2x192xf32>
    %134 = arith.negf %133 : vector<2x192xf32>
    %135 = math.exp %134 : vector<2x192xf32>
    %cst_35 = arith.constant 1.000000e+00 : f32
    %136 = vector.broadcast %cst_35 : f32 to vector<2x192xf32>
    %137 = arith.addf %136, %135 : vector<2x192xf32>
    %138 = arith.divf %136, %137 : vector<2x192xf32>
    %139 = vector.extract_strided_slice %138 {offsets = [0, 0], sizes = [2, 64], strides = [1, 1]} : vector<2x192xf32> to vector<2x64xf32>
    %140 = vector.extract_strided_slice %138 {offsets = [0, 64], sizes = [2, 64], strides = [1, 1]} : vector<2x192xf32> to vector<2x64xf32>
    %141 = vector.extract_strided_slice %138 {offsets = [0, 128], sizes = [2, 64], strides = [1, 1]} : vector<2x192xf32> to vector<2x64xf32>
    %142 = vector.extract_strided_slice %132 {offsets = [0, 192], sizes = [2, 64], strides = [1, 1]} : vector<2x256xf32> to vector<2x64xf32>
    %143 = math.tanh %142 : vector<2x64xf32>
    %144 = arith.mulf %140, %121 : vector<2x64xf32>
    %145 = arith.mulf %139, %143 : vector<2x64xf32>
    %146 = arith.addf %144, %145 : vector<2x64xf32>
    %147 = math.tanh %146 : vector<2x64xf32>
    %148 = arith.mulf %141, %147 : vector<2x64xf32>
    %149 = arith.index_cast %c5_i32 : i32 to index
    %c0_36 = arith.constant 0 : index
    %c0_37 = arith.constant 0 : index
    %150 = vector.load %arg2[%149, %c0_36, %c0_37] : memref<8x2x64xf32, #tpu.memory_space<vmem>>, vector<1x2x64xf32>
    %151 = vector.shape_cast %150 : vector<1x2x64xf32> to vector<2x64xf32>
    %152 = vector.shape_cast %148 : vector<2x64xf32> to vector<1x2x64xf32>
    tpu.vector_store %arg2[%149, %c0_36, %c0_37], %152 {strides = array<i32>} : memref<8x2x64xf32, #tpu.memory_space<vmem>>, vector<1x2x64xf32>,
    %c6_i32 = arith.constant 6 : i32
    %153 = arith.index_cast %c6_i32 : i32 to index
    %c0_38 = arith.constant 0 : index
    %c0_39 = arith.constant 0 : index
    %154 = vector.load %arg0[%153, %c0_38, %c0_39] : memref<8x2x256xf32, #tpu.memory_space<vmem>>, vector<1x2x256xf32>
    %155 = vector.shape_cast %154 : vector<1x2x256xf32> to vector<2x256xf32>
    %cst_40 = arith.constant dense<0.000000e+00> : vector<2x256xf32>
    %156 = tpu.matmul %148, %0, %cst_40 {dimension_numbers = #tpu.dot_dimension_numbers<[1], [0], [0], [1], [0, 0, 1, 1], [], []>} : vector<2x64xf32>, vector<64x256xf32>, vector<2x256xf32> -> vector<2x256xf32>
    %157 = arith.addf %155, %156 : vector<2x256xf32>
    %158 = vector.extract_strided_slice %157 {offsets = [0, 0], sizes = [2, 192], strides = [1, 1]} : vector<2x256xf32> to vector<2x192xf32>
    %159 = arith.negf %158 : vector<2x192xf32>
    %160 = math.exp %159 : vector<2x192xf32>
    %cst_41 = arith.constant 1.000000e+00 : f32
    %161 = vector.broadcast %cst_41 : f32 to vector<2x192xf32>
    %162 = arith.addf %161, %160 : vector<2x192xf32>
    %163 = arith.divf %161, %162 : vector<2x192xf32>
    %164 = vector.extract_strided_slice %163 {offsets = [0, 0], sizes = [2, 64], strides = [1, 1]} : vector<2x192xf32> to vector<2x64xf32>
    %165 = vector.extract_strided_slice %163 {offsets = [0, 64], sizes = [2, 64], strides = [1, 1]} : vector<2x192xf32> to vector<2x64xf32>
    %166 = vector.extract_strided_slice %163 {offsets = [0, 128], sizes = [2, 64], strides = [1, 1]} : vector<2x192xf32> to vector<2x64xf32>
    %167 = vector.extract_strided_slice %157 {offsets = [0, 192], sizes = [2, 64], strides = [1, 1]} : vector<2x256xf32> to vector<2x64xf32>
    %168 = math.tanh %167 : vector<2x64xf32>
    %169 = arith.mulf %165, %146 : vector<2x64xf32>
    %170 = arith.mulf %164, %168 : vector<2x64xf32>
    %171 = arith.addf %169, %170 : vector<2x64xf32>
    %172 = math.tanh %171 : vector<2x64xf32>
    %173 = arith.mulf %166, %172 : vector<2x64xf32>
    %174 = arith.index_cast %c6_i32 : i32 to index
    %c0_42 = arith.constant 0 : index
    %c0_43 = arith.constant 0 : index
    %175 = vector.load %arg2[%174, %c0_42, %c0_43] : memref<8x2x64xf32, #tpu.memory_space<vmem>>, vector<1x2x64xf32>
    %176 = vector.shape_cast %175 : vector<1x2x64xf32> to vector<2x64xf32>
    %177 = vector.shape_cast %173 : vector<2x64xf32> to vector<1x2x64xf32>
    tpu.vector_store %arg2[%174, %c0_42, %c0_43], %177 {strides = array<i32>} : memref<8x2x64xf32, #tpu.memory_space<vmem>>, vector<1x2x64xf32>,
    %c7_i32 = arith.constant 7 : i32
    %178 = arith.index_cast %c7_i32 : i32 to index
    %c0_44 = arith.constant 0 : index
    %c0_45 = arith.constant 0 : index
    %179 = vector.load %arg0[%178, %c0_44, %c0_45] : memref<8x2x256xf32, #tpu.memory_space<vmem>>, vector<1x2x256xf32>
    %180 = vector.shape_cast %179 : vector<1x2x256xf32> to vector<2x256xf32>
    %cst_46 = arith.constant dense<0.000000e+00> : vector<2x256xf32>
    %181 = tpu.matmul %173, %0, %cst_46 {dimension_numbers = #tpu.dot_dimension_numbers<[1], [0], [0], [1], [0, 0, 1, 1], [], []>} : vector<2x64xf32>, vector<64x256xf32>, vector<2x256xf32> -> vector<2x256xf32>
    %182 = arith.addf %180, %181 : vector<2x256xf32>
    %183 = vector.extract_strided_slice %182 {offsets = [0, 0], sizes = [2, 192], strides = [1, 1]} : vector<2x256xf32> to vector<2x192xf32>
    %184 = arith.negf %183 : vector<2x192xf32>
    %185 = math.exp %184 : vector<2x192xf32>
    %cst_47 = arith.constant 1.000000e+00 : f32
    %186 = vector.broadcast %cst_47 : f32 to vector<2x192xf32>
    %187 = arith.addf %186, %185 : vector<2x192xf32>
    %188 = arith.divf %186, %187 : vector<2x192xf32>
    %189 = vector.extract_strided_slice %188 {offsets = [0, 0], sizes = [2, 64], strides = [1, 1]} : vector<2x192xf32> to vector<2x64xf32>
    %190 = vector.extract_strided_slice %188 {offsets = [0, 64], sizes = [2, 64], strides = [1, 1]} : vector<2x192xf32> to vector<2x64xf32>
    %191 = vector.extract_strided_slice %188 {offsets = [0, 128], sizes = [2, 64], strides = [1, 1]} : vector<2x192xf32> to vector<2x64xf32>
    %192 = vector.extract_strided_slice %182 {offsets = [0, 192], sizes = [2, 64], strides = [1, 1]} : vector<2x256xf32> to vector<2x64xf32>
    %193 = math.tanh %192 : vector<2x64xf32>
    %194 = arith.mulf %190, %171 : vector<2x64xf32>
    %195 = arith.mulf %189, %193 : vector<2x64xf32>
    %196 = arith.addf %194, %195 : vector<2x64xf32>
    %197 = math.tanh %196 : vector<2x64xf32>
    %198 = arith.mulf %191, %197 : vector<2x64xf32>
    %199 = arith.index_cast %c7_i32 : i32 to index
    %c0_48 = arith.constant 0 : index
    %c0_49 = arith.constant 0 : index
    %200 = vector.load %arg2[%199, %c0_48, %c0_49] : memref<8x2x64xf32, #tpu.memory_space<vmem>>, vector<1x2x64xf32>
    %201 = vector.shape_cast %200 : vector<1x2x64xf32> to vector<2x64xf32>
    %202 = vector.shape_cast %198 : vector<2x64xf32> to vector<1x2x64xf32>
    tpu.vector_store %arg2[%199, %c0_48, %c0_49], %202 {strides = array<i32>} : memref<8x2x64xf32, #tpu.memory_space<vmem>>, vector<1x2x64xf32>,
    %c8_i32 = arith.constant 8 : i32
    return
  }
}

</mosaic_0001>

<llo_original>
// kernel: sequence_decoder_forward.1
$region0: #{sequence_decoder_forward.1}
  #allocation0 [shape = 'u32[]', space=smem, size = 0x4, offset = 0x4, fixed_abs, tag = 'smem constant byte address 0x4 - core index']
  #allocation1 [shape = 'u32[144,128]{1,0:T(1,128)}', space=vmem, size = 0x12000, scoped, tag = 'internal scratch']
  %s0 = inlined_call_operand.hbm [shape: f32[8,2,256], index: 0, kind: input, shape index: {}]
  %s1 = inlined_call_operand.hbm [shape: f32[64,256], index: 1, kind: input, shape index: {}]
  %s2 = inlined_call_operand.hbm [shape: f32[8,2,64], index: 2, kind: output, shape index: {}]
  %s3 = sld [smem:[#allocation0]]
  $region26: #{sequence_decoder_forward.1} parent=0
    _
  %s5 = ssub.s32 1, %s3
  %s6 = scalar_select 0, %s5, %s3
  $region1: #{sequence_decoder_forward.1} parent=0
    #allocation2 [shape = 'u8[16384]{0}', space=vmem, size = 0x4000, scoped, tag = 'input window, operand 0, single buffered']
    #allocation3 [shape = 's32[1]{0}', space=sflag, size = 0x4, scoped, tag = 'scoped memory for sequence_decoder_forward.1']
    #allocation4 [shape = 's32[1]{0}', space=sflag, size = 0x4, scoped, tag = 'scoped memory for sequence_decoder_forward.1']
    #allocation5 [shape = 'u8[65536]{0}', space=vmem, size = 0x10000, scoped, tag = 'input window, operand 1, single buffered']
    #allocation6 [shape = 's32[1]{0}', space=sflag, size = 0x4, scoped, tag = 'scoped memory for sequence_decoder_forward.1']
    #allocation7 [shape = 'u8[8192]{0}', space=vmem, size = 0x2000, scoped, tag = 'output window, operand 0, single buffered']
    %7 = vsyncpa [#allocation3], 0
    %8 = vsyncpa [#allocation6], 0
    %9 = vsyncpa [#allocation4], 0
    // Predicated region
    $region2: #{sequence_decoder_forward.1} parent=1 // pred_check
      _
    $region3: #{sequence_decoder_forward.1} parent=1 // pred_check_branch
      %11 = sbr.rel (0) target = $region5
    $region4: #{sequence_decoder_forward.1} parent=1 // pred_region
      %s13 = ssub.s32 512, 512
      %14 = vsyncadd [#allocation3], %s13
      %s15 = sshll.u32 [#allocation2], 4
      %s16 = int_to_ptr.vmem [resolvable:$true] %s15
      %21 = dma.hbm_to_vmem [thread:$0]  %s0, 512, %s16, [#allocation3], 64, 64, 4
    $region5: #{sequence_decoder_forward.1} parent=1 // pred_fallthru
      _
    // Predicated region
    $region6: #{sequence_decoder_forward.1} parent=1 // pred_check
      _
    $region7: #{sequence_decoder_forward.1} parent=1 // pred_check_branch
      %23 = sbr.rel (0) target = $region9
    $region8: #{sequence_decoder_forward.1} parent=1 // pred_region
      %s25 = ssub.s32 2048, 2048
      %26 = vsyncadd [#allocation6], %s25
      %s27 = sshll.u32 [#allocation5], 4
      %s28 = int_to_ptr.vmem [resolvable:$true] %s27
      %33 = dma.hbm_to_vmem [thread:$0]  %s1, 2048, %s28, [#allocation6], 256, 256, 16
    $region9: #{sequence_decoder_forward.1} parent=1 // pred_fallthru
      _
    // Predicated region
    $region10: #{sequence_decoder_forward.1} parent=1 // pred_check
      _
    $region11: #{sequence_decoder_forward.1} parent=1 // pred_check_branch
      %35 = sbr.rel (0) target = $region13
    $region12: #{sequence_decoder_forward.1} parent=1 // pred_region
      %36 = dma.done [#allocation3], 512
    $region13: #{sequence_decoder_forward.1} parent=1 // pred_fallthru
      _
    // Predicated region
    $region14: #{sequence_decoder_forward.1} parent=1 // pred_check
      _
    $region15: #{sequence_decoder_forward.1} parent=1 // pred_check_branch
      %38 = sbr.rel (0) target = $region17
    $region16: #{sequence_decoder_forward.1} parent=1 // pred_region
      %39 = dma.done [#allocation6], 2048
    $region17: #{sequence_decoder_forward.1} parent=1 // pred_fallthru
      _
    %v40 = vld [vmem:[#allocation5] sm:$0xff]
    %v41 = vld [vmem:[#allocation5 + $0x8] sm:$0xff]
    %v42 = vld [vmem:[#allocation5 + $0x10] sm:$0xff]
    %v43 = vld [vmem:[#allocation5 + $0x18] sm:$0xff]
    %v44 = vld [vmem:[#allocation5 + $0x20] sm:$0xff]
    %v45 = vld [vmem:[#allocation5 + $0x28] sm:$0xff]
    %v46 = vld [vmem:[#allocation5 + $0x30] sm:$0xff]
    %v47 = vld [vmem:[#allocation5 + $0x38] sm:$0xff]
    %v48 = vld [vmem:[#allocation5 + $0x40] sm:$0xff]
    %v49 = vld [vmem:[#allocation5 + $0x48] sm:$0xff]
    %v50 = vld [vmem:[#allocation5 + $0x50] sm:$0xff]
    %v51 = vld [vmem:[#allocation5 + $0x58] sm:$0xff]
    %v52 = vld [vmem:[#allocation5 + $0x60] sm:$0xff]
    %v53 = vld [vmem:[#allocation5 + $0x68] sm:$0xff]
    %v54 = vld [vmem:[#allocation5 + $0x70] sm:$0xff]
    %v55 = vld [vmem:[#allocation5 + $0x78] sm:$0xff]
    %v56 = vld [vmem:[#allocation2] sm:$0xf]
    %vm57 = vcmask 523264
    %v59 = vsel %vm57, 0.0, 0
    %61 = vmatprep.subr.mxu0 %v41
    %62 = vmatpush1.msra.mxu0 %v40
    %63 = vmatprep.subr.mxu0 %v43
    %64 = vmatpush1.msra.mxu0 %v42
    %65 = vmatprep.subr.mxu0 %v45
    %66 = vmatpush1.msra.mxu0 %v44
    %67 = vmatprep.subr.mxu0 %v47
    %68 = vmatpush1.msra.mxu0 %v46
    %69 = vmatprep.subr.mxu0 %v49
    %70 = vmatpush1.msra.mxu0 %v48
    %71 = vmatprep.subr.mxu0 %v51
    %72 = vmatpush1.msra.mxu0 %v50
    %73 = vmatprep.subr.mxu0 %v53
    %74 = vmatpush1.msra.mxu0 %v52
    %75 = vmatprep.subr.mxu0 %v55
    %76 = vmatpush1.msra.mxu0 %v54
    %77 = vmatprep.subr.mxu0 0.0
    %78 = vmatpush1.msra.mxu0 0.0
    %79 = vmatprep.subr.mxu0 0.0
    %80 = vmatpush1.msra.mxu0 0.0
    %81 = vmatprep.subr.mxu0 0.0
    %82 = vmatpush1.msra.mxu0 0.0
    %83 = vmatprep.subr.mxu0 0.0
    %84 = vmatpush1.msra.mxu0 0.0
    %85 = vmatprep.subr.mxu0 0.0
    %86 = vmatpush1.msra.mxu0 0.0
    %87 = vmatprep.subr.mxu0 0.0
    %88 = vmatpush1.msra.mxu0 0.0
    %89 = vmatprep.subr.mxu0 0.0
    %90 = vmatpush1.msra.mxu0 0.0
    %91 = vmatprep.subr.mxu0 0.0
    %92 = vmatpush1.msra.mxu0 0.0
    %93 = vmatprep.subr.mxu0 0.0
    %94 = vmatpush1.msra.mxu0 0.0
    %95 = vmatprep.subr.mxu0 0.0
    %96 = vmatpush1.msra.mxu0 0.0
    %97 = vmatprep.subr.mxu0 0.0
    %98 = vmatpush1.msra.mxu0 0.0
    %99 = vmatprep.subr.mxu0 0.0
    %100 = vmatpush1.msra.mxu0 0.0
    %101 = vmatprep.subr.mxu0 0.0
    %102 = vmatpush1.msra.mxu0 0.0
    %103 = vmatprep.subr.mxu0 0.0
    %104 = vmatpush1.msra.mxu0 0.0
    %105 = vmatprep.subr.mxu0 0.0
    %106 = vmatpush1.msra.mxu0 0.0
    %107 = vmatprep.subr.mxu0 0.0
    %108 = vmatpush1.msra.mxu0 0.0
    %109 = vmatprep.subr.mxu0 0.0
    %110 = vmatpush1.msra.mxu0 0.0
    %111 = vmatprep.subr.mxu0 0.0
    %112 = vmatpush1.msra.mxu0 0.0
    %113 = vmatprep.subr.mxu0 0.0
    %114 = vmatpush1.msra.mxu0 0.0
    %115 = vmatprep.subr.mxu0 0.0
    %116 = vmatpush1.msra.mxu0 0.0
    %117 = vmatprep.subr.mxu0 0.0
    %118 = vmatpush1.msra.mxu0 0.0
    %119 = vmatprep.subr.mxu0 0.0
    %120 = vmatpush1.msra.mxu0 0.0
    %121 = vmatprep.subr.mxu0 0.0
    %122 = vmatpush1.msra.mxu0 0.0
    %123 = vmatprep.subr.mxu0 0.0
    %124 = vmatpush1.msra.mxu0 0.0
    %125 = vmatprep.mubr.f32.mxu0 0.0
    %126 = vmatmul.mubr.f32.gmra.mrb[0].mxu0 %v59
    %v127 = vpop.f32.mrb[0].mxu0
    %v128 = vadd.f32 0.0, %v127
    %v129 = vpop.f32.mrb[0].mxu0
    %v130 = vadd.f32 0.0, %v129
    %131 = vdwg.mxu0
    %v134 = vcombine.low %v128, %v130
    %v136 = vunpack.c.l.s4 1983009808
    %v137 = vunpack.c.0.s8 %v136
    %v138 = vlaneseq
    %v139 = vshrl.u32 %v138, 7
    %v140 = vsub.s32 %v137, %v139
    %v141 = vrot.slane %v134, %v140
    %v143 = vadd.f32 %v56, %v141
    %v144 = vxor.u32 %v143, 2147483648
    %v145 = vmul.f32 %v144, 1.442695
    %v146 = vpow.pop %v145
    %v147 = vadd.f32 %v146, 1.0
    %v148 = vrcp.pop %v147
    %v149 = vmul.f32 1.0, %v148
    %151 = vrot.lane.b32.xlu0 %v143, 64
    %v152 = vpop.permute.xlu0 %151
    %v153 = vrot.slane %v152, 2
    %v155 = vtanh.pop %v153
    %v156 = vmul.f32 %v149, 0.0
    %v157 = vmul.f32 %v149, %v155
    %159 = vrot.lane.b32.xlu0 %v157, 64
    %v160 = vpop.permute.xlu0 %159
    %v162 = vadd.f32 %v156, %v160
    %v163 = vtanh.pop %v162
    %v165 = vrot.slane %v149, 2
    %168 = vrot.lane.b32.xlu0 %v163, 64
    %v169 = vpop.permute.xlu0 %168
    %v171 = vmul.f32 %v165, %v169
    %vm172 = vcmask 517120
    %173 = vst.msk [vmem:[#allocation7] sm:$0x3] %vm172, %v171
    %s174 = scalar_lea.vmem [#allocation2], 4
    %v175 = vld [vmem:[%s174] sm:$0xf]
    %v177 = vsel %vm57, %v171, 0
    %179 = vmatprep.subr.mxu0 %v41
    %180 = vmatpush1.msra.mxu0 %v40
    %181 = vmatprep.subr.mxu0 %v43
    %182 = vmatpush1.msra.mxu0 %v42
    %183 = vmatprep.subr.mxu0 %v45
    %184 = vmatpush1.msra.mxu0 %v44
    %185 = vmatprep.subr.mxu0 %v47
    %186 = vmatpush1.msra.mxu0 %v46
    %187 = vmatprep.subr.mxu0 %v49
    %188 = vmatpush1.msra.mxu0 %v48
    %189 = vmatprep.subr.mxu0 %v51
    %190 = vmatpush1.msra.mxu0 %v50
    %191 = vmatprep.subr.mxu0 %v53
    %192 = vmatpush1.msra.mxu0 %v52
    %193 = vmatprep.subr.mxu0 %v55
    %194 = vmatpush1.msra.mxu0 %v54
    %195 = vmatprep.subr.mxu0 0.0
    %196 = vmatpush1.msra.mxu0 0.0
    %197 = vmatprep.subr.mxu0 0.0
    %198 = vmatpush1.msra.mxu0 0.0
    %199 = vmatprep.subr.mxu0 0.0
    %200 = vmatpush1.msra.mxu0 0.0
    %201 = vmatprep.subr.mxu0 0.0
    %202 = vmatpush1.msra.mxu0 0.0
    %203 = vmatprep.subr.mxu0 0.0
    %204 = vmatpush1.msra.mxu0 0.0
    %205 = vmatprep.subr.mxu0 0.0
    %206 = vmatpush1.msra.mxu0 0.0
    %207 = vmatprep.subr.mxu0 0.0
    %208 = vmatpush1.msra.mxu0 0.0
    %209 = vmatprep.subr.mxu0 0.0
    %210 = vmatpush1.msra.mxu0 0.0
    %211 = vmatprep.subr.mxu0 0.0
    %212 = vmatpush1.msra.mxu0 0.0
    %213 = vmatprep.subr.mxu0 0.0
    %214 = vmatpush1.msra.mxu0 0.0
    %215 = vmatprep.subr.mxu0 0.0
    %216 = vmatpush1.msra.mxu0 0.0
    %217 = vmatprep.subr.mxu0 0.0
    %218 = vmatpush1.msra.mxu0 0.0
    %219 = vmatprep.subr.mxu0 0.0
    %220 = vmatpush1.msra.mxu0 0.0
    %221 = vmatprep.subr.mxu0 0.0
    %222 = vmatpush1.msra.mxu0 0.0
    %223 = vmatprep.subr.mxu0 0.0
    %224 = vmatpush1.msra.mxu0 0.0
    %225 = vmatprep.subr.mxu0 0.0
    %226 = vmatpush1.msra.mxu0 0.0
    %227 = vmatprep.subr.mxu0 0.0
    %228 = vmatpush1.msra.mxu0 0.0
    %229 = vmatprep.subr.mxu0 0.0
    %230 = vmatpush1.msra.mxu0 0.0
    %231 = vmatprep.subr.mxu0 0.0
    %232 = vmatpush1.msra.mxu0 0.0
    %233 = vmatprep.subr.mxu0 0.0
    %234 = vmatpush1.msra.mxu0 0.0
    %235 = vmatprep.subr.mxu0 0.0
    %236 = vmatpush1.msra.mxu0 0.0
    %237 = vmatprep.subr.mxu0 0.0
    %238 = vmatpush1.msra.mxu0 0.0
    %239 = vmatprep.subr.mxu0 0.0
    %240 = vmatpush1.msra.mxu0 0.0
    %241 = vmatprep.subr.mxu0 0.0
    %242 = vmatpush1.msra.mxu0 0.0
    %243 = vmatprep.mubr.f32.mxu0 0.0
    %244 = vmatmul.mubr.f32.gmra.mrb[0].mxu0 %v177
    %v245 = vpop.f32.mrb[0].mxu0
    %v246 = vadd.f32 0.0, %v245
    %v247 = vpop.f32.mrb[0].mxu0
    %v248 = vadd.f32 0.0, %v247
    %249 = vdwg.mxu0
    %v252 = vcombine.low %v246, %v248
    %v254 = vunpack.c.l.s4 1983009808
    %v255 = vunpack.c.0.s8 %v254
    %v256 = vlaneseq
    %v257 = vshrl.u32 %v256, 7
    %v258 = vsub.s32 %v255, %v257
    %v259 = vrot.slane %v252, %v258
    %v261 = vadd.f32 %v175, %v259
    %v262 = vxor.u32 %v261, 2147483648
    %v263 = vmul.f32 %v262, 1.442695
    %v264 = vpow.pop %v263
    %v265 = vadd.f32 %v264, 1.0
    %v266 = vrcp.pop %v265
    %v267 = vmul.f32 1.0, %v266
    %269 = vrot.lane.b32.xlu0 %v261, 64
    %v270 = vpop.permute.xlu0 %269
    %v271 = vrot.slane %v270, 2
    %v273 = vtanh.pop %v271
    %v274 = vmul.f32 %v267, %v162
    %v275 = vmul.f32 %v267, %v273
    %277 = vrot.lane.b32.xlu0 %v275, 64
    %v278 = vpop.permute.xlu0 %277
    %v280 = vadd.f32 %v274, %v278
    %v281 = vtanh.pop %v280
    %v283 = vrot.slane %v267, 2
    %286 = vrot.lane.b32.xlu0 %v281, 64
    %v287 = vpop.permute.xlu0 %286
    %v289 = vmul.f32 %v283, %v287
    %s290 = scalar_lea.vmem [#allocation7], 2
    %291 = vst.msk [vmem:[%s290] sm:$0x3] %vm172, %v289
    %s292 = scalar_lea.vmem [#allocation2], 8
    %v293 = vld [vmem:[%s292] sm:$0xf]
    %v295 = vsel %vm57, %v289, 0
    %297 = vmatprep.subr.mxu0 %v41
    %298 = vmatpush1.msra.mxu0 %v40
    %299 = vmatprep.subr.mxu0 %v43
    %300 = vmatpush1.msra.mxu0 %v42
    %301 = vmatprep.subr.mxu0 %v45
    %302 = vmatpush1.msra.mxu0 %v44
    %303 = vmatprep.subr.mxu0 %v47
    %304 = vmatpush1.msra.mxu0 %v46
    %305 = vmatprep.subr.mxu0 %v49
    %306 = vmatpush1.msra.mxu0 %v48
    %307 = vmatprep.subr.mxu0 %v51
    %308 = vmatpush1.msra.mxu0 %v50
    %309 = vmatprep.subr.mxu0 %v53
    %310 = vmatpush1.msra.mxu0 %v52
    %311 = vmatprep.subr.mxu0 %v55
    %312 = vmatpush1.msra.mxu0 %v54
    %313 = vmatprep.subr.mxu0 0.0
    %314 = vmatpush1.msra.mxu0 0.0
    %315 = vmatprep.subr.mxu0 0.0
    %316 = vmatpush1.msra.mxu0 0.0
    %317 = vmatprep.subr.mxu0 0.0
    %318 = vmatpush1.msra.mxu0 0.0
    %319 = vmatprep.subr.mxu0 0.0
    %320 = vmatpush1.msra.mxu0 0.0
    %321 = vmatprep.subr.mxu0 0.0
    %322 = vmatpush1.msra.mxu0 0.0
    %323 = vmatprep.subr.mxu0 0.0
    %324 = vmatpush1.msra.mxu0 0.0
    %325 = vmatprep.subr.mxu0 0.0
    %326 = vmatpush1.msra.mxu0 0.0
    %327 = vmatprep.subr.mxu0 0.0
    %328 = vmatpush1.msra.mxu0 0.0
    %329 = vmatprep.subr.mxu0 0.0
    %330 = vmatpush1.msra.mxu0 0.0
    %331 = vmatprep.subr.mxu0 0.0
    %332 = vmatpush1.msra.mxu0 0.0
    %333 = vmatprep.subr.mxu0 0.0
    %334 = vmatpush1.msra.mxu0 0.0
    %335 = vmatprep.subr.mxu0 0.0
    %336 = vmatpush1.msra.mxu0 0.0
    %337 = vmatprep.subr.mxu0 0.0
    %338 = vmatpush1.msra.mxu0 0.0
    %339 = vmatprep.subr.mxu0 0.0
    %340 = vmatpush1.msra.mxu0 0.0
    %341 = vmatprep.subr.mxu0 0.0
    %342 = vmatpush1.msra.mxu0 0.0
    %343 = vmatprep.subr.mxu0 0.0
    %344 = vmatpush1.msra.mxu0 0.0
    %345 = vmatprep.subr.mxu0 0.0
    %346 = vmatpush1.msra.mxu0 0.0
    %347 = vmatprep.subr.mxu0 0.0
    %348 = vmatpush1.msra.mxu0 0.0
    %349 = vmatprep.subr.mxu0 0.0
    %350 = vmatpush1.msra.mxu0 0.0
    %351 = vmatprep.subr.mxu0 0.0
    %352 = vmatpush1.msra.mxu0 0.0
    %353 = vmatprep.subr.mxu0 0.0
    %354 = vmatpush1.msra.mxu0 0.0
    %355 = vmatprep.subr.mxu0 0.0
    %356 = vmatpush1.msra.mxu0 0.0
    %357 = vmatprep.subr.mxu0 0.0
    %358 = vmatpush1.msra.mxu0 0.0
    %359 = vmatprep.subr.mxu0 0.0
    %360 = vmatpush1.msra.mxu0 0.0
    %361 = vmatprep.mubr.f32.mxu0 0.0
    %362 = vmatmul.mubr.f32.gmra.mrb[0].mxu0 %v295
    %v363 = vpop.f32.mrb[0].mxu0
    %v364 = vadd.f32 0.0, %v363
    %v365 = vpop.f32.mrb[0].mxu0
    %v366 = vadd.f32 0.0, %v365
    %367 = vdwg.mxu0
    %v370 = vcombine.low %v364, %v366
    %v372 = vunpack.c.l.s4 1983009808
    %v373 = vunpack.c.0.s8 %v372
    %v374 = vlaneseq
    %v375 = vshrl.u32 %v374, 7
    %v376 = vsub.s32 %v373, %v375
    %v377 = vrot.slane %v370, %v376
    %v379 = vadd.f32 %v293, %v377
    %v380 = vxor.u32 %v379, 2147483648
    %v381 = vmul.f32 %v380, 1.442695
    %v382 = vpow.pop %v381
    %v383 = vadd.f32 %v382, 1.0
    %v384 = vrcp.pop %v383
    %v385 = vmul.f32 1.0, %v384
    %387 = vrot.lane.b32.xlu0 %v379, 64
    %v388 = vpop.permute.xlu0 %387
    %v389 = vrot.slane %v388, 2
    %v391 = vtanh.pop %v389
    %v392 = vmul.f32 %v385, %v280
    %v393 = vmul.f32 %v385, %v391
    %395 = vrot.lane.b32.xlu0 %v393, 64
    %v396 = vpop.permute.xlu0 %395
    %v398 = vadd.f32 %v392, %v396
    %v399 = vtanh.pop %v398
    %v401 = vrot.slane %v385, 2
    %404 = vrot.lane.b32.xlu0 %v399, 64
    %v405 = vpop.permute.xlu0 %404
    %v407 = vmul.f32 %v401, %v405
    %s408 = scalar_lea.vmem [#allocation7], 4
    %409 = vst.msk [vmem:[%s408] sm:$0x3] %vm172, %v407
    %s410 = scalar_lea.vmem [#allocation2], 12
    %v411 = vld [vmem:[%s410] sm:$0xf]
    %v413 = vsel %vm57, %v407, 0
    %415 = vmatprep.subr.mxu0 %v41
    %416 = vmatpush1.msra.mxu0 %v40
    %417 = vmatprep.subr.mxu0 %v43
    %418 = vmatpush1.msra.mxu0 %v42
    %419 = vmatprep.subr.mxu0 %v45
    %420 = vmatpush1.msra.mxu0 %v44
    %421 = vmatprep.subr.mxu0 %v47
    %422 = vmatpush1.msra.mxu0 %v46
    %423 = vmatprep.subr.mxu0 %v49
    %424 = vmatpush1.msra.mxu0 %v48
    %425 = vmatprep.subr.mxu0 %v51
    %426 = vmatpush1.msra.mxu0 %v50
    %427 = vmatprep.subr.mxu0 %v53
    %428 = vmatpush1.msra.mxu0 %v52
    %429 = vmatprep.subr.mxu0 %v55
    %430 = vmatpush1.msra.mxu0 %v54
    %431 = vmatprep.subr.mxu0 0.0
    %432 = vmatpush1.msra.mxu0 0.0
    %433 = vmatprep.subr.mxu0 0.0
    %434 = vmatpush1.msra.mxu0 0.0
    %435 = vmatprep.subr.mxu0 0.0
    %436 = vmatpush1.msra.mxu0 0.0
    %437 = vmatprep.subr.mxu0 0.0
    %438 = vmatpush1.msra.mxu0 0.0
    %439 = vmatprep.subr.mxu0 0.0
    %440 = vmatpush1.msra.mxu0 0.0
    %441 = vmatprep.subr.mxu0 0.0
    %442 = vmatpush1.msra.mxu0 0.0
    %443 = vmatprep.subr.mxu0 0.0
    %444 = vmatpush1.msra.mxu0 0.0
    %445 = vmatprep.subr.mxu0 0.0
    %446 = vmatpush1.msra.mxu0 0.0
    %447 = vmatprep.subr.mxu0 0.0
    %448 = vmatpush1.msra.mxu0 0.0
    %449 = vmatprep.subr.mxu0 0.0
    %450 = vmatpush1.msra.mxu0 0.0
    %451 = vmatprep.subr.mxu0 0.0
    %452 = vmatpush1.msra.mxu0 0.0
    %453 = vmatprep.subr.mxu0 0.0
    %454 = vmatpush1.msra.mxu0 0.0
    %455 = vmatprep.subr.mxu0 0.0
    %456 = vmatpush1.msra.mxu0 0.0
    %457 = vmatprep.subr.mxu0 0.0
    %458 = vmatpush1.msra.mxu0 0.0
    %459 = vmatprep.subr.mxu0 0.0
    %460 = vmatpush1.msra.mxu0 0.0
    %461 = vmatprep.subr.mxu0 0.0
    %462 = vmatpush1.msra.mxu0 0.0
    %463 = vmatprep.subr.mxu0 0.0
    %464 = vmatpush1.msra.mxu0 0.0
    %465 = vmatprep.subr.mxu0 0.0
    %466 = vmatpush1.msra.mxu0 0.0
    %467 = vmatprep.subr.mxu0 0.0
    %468 = vmatpush1.msra.mxu0 0.0
    %469 = vmatprep.subr.mxu0 0.0
    %470 = vmatpush1.msra.mxu0 0.0
    %471 = vmatprep.subr.mxu0 0.0
    %472 = vmatpush1.msra.mxu0 0.0
    %473 = vmatprep.subr.mxu0 0.0
    %474 = vmatpush1.msra.mxu0 0.0
    %475 = vmatprep.subr.mxu0 0.0
    %476 = vmatpush1.msra.mxu0 0.0
    %477 = vmatprep.subr.mxu0 0.0
    %478 = vmatpush1.msra.mxu0 0.0
    %479 = vmatprep.mubr.f32.mxu0 0.0
    %480 = vmatmul.mubr.f32.gmra.mrb[0].mxu0 %v413
    %v481 = vpop.f32.mrb[0].mxu0
    %v482 = vadd.f32 0.0, %v481
    %v483 = vpop.f32.mrb[0].mxu0
    %v484 = vadd.f32 0.0, %v483
    %485 = vdwg.mxu0
    %v488 = vcombine.low %v482, %v484
    %v490 = vunpack.c.l.s4 1983009808
    %v491 = vunpack.c.0.s8 %v490
    %v492 = vlaneseq
    %v493 = vshrl.u32 %v492, 7
    %v494 = vsub.s32 %v491, %v493
    %v495 = vrot.slane %v488, %v494
    %v497 = vadd.f32 %v411, %v495
    %v498 = vxor.u32 %v497, 2147483648
    %v499 = vmul.f32 %v498, 1.442695
    %v500 = vpow.pop %v499
    %v501 = vadd.f32 %v500, 1.0
    %v502 = vrcp.pop %v501
    %v503 = vmul.f32 1.0, %v502
    %505 = vrot.lane.b32.xlu0 %v497, 64
    %v506 = vpop.permute.xlu0 %505
    %v507 = vrot.slane %v506, 2
    %v509 = vtanh.pop %v507
    %v510 = vmul.f32 %v503, %v398
    %v511 = vmul.f32 %v503, %v509
    %513 = vrot.lane.b32.xlu0 %v511, 64
    %v514 = vpop.permute.xlu0 %513
    %v516 = vadd.f32 %v510, %v514
    %v517 = vtanh.pop %v516
    %v519 = vrot.slane %v503, 2
    %522 = vrot.lane.b32.xlu0 %v517, 64
    %v523 = vpop.permute.xlu0 %522
    %v525 = vmul.f32 %v519, %v523
    %s526 = scalar_lea.vmem [#allocation7], 6
    %527 = vst.msk [vmem:[%s526] sm:$0x3] %vm172, %v525
    %s528 = scalar_lea.vmem [#allocation2], 16
    %v529 = vld [vmem:[%s528] sm:$0xf]
    %v531 = vsel %vm57, %v525, 0
    %533 = vmatprep.subr.mxu0 %v41
    %534 = vmatpush1.msra.mxu0 %v40
    %535 = vmatprep.subr.mxu0 %v43
    %536 = vmatpush1.msra.mxu0 %v42
    %537 = vmatprep.subr.mxu0 %v45
    %538 = vmatpush1.msra.mxu0 %v44
    %539 = vmatprep.subr.mxu0 %v47
    %540 = vmatpush1.msra.mxu0 %v46
    %541 = vmatprep.subr.mxu0 %v49
    %542 = vmatpush1.msra.mxu0 %v48
    %543 = vmatprep.subr.mxu0 %v51
    %544 = vmatpush1.msra.mxu0 %v50
    %545 = vmatprep.subr.mxu0 %v53
    %546 = vmatpush1.msra.mxu0 %v52
    %547 = vmatprep.subr.mxu0 %v55
    %548 = vmatpush1.msra.mxu0 %v54
    %549 = vmatprep.subr.mxu0 0.0
    %550 = vmatpush1.msra.mxu0 0.0
    %551 = vmatprep.subr.mxu0 0.0
    %552 = vmatpush1.msra.mxu0 0.0
    %553 = vmatprep.subr.mxu0 0.0
    %554 = vmatpush1.msra.mxu0 0.0
    %555 = vmatprep.subr.mxu0 0.0
    %556 = vmatpush1.msra.mxu0 0.0
    %557 = vmatprep.subr.mxu0 0.0
    %558 = vmatpush1.msra.mxu0 0.0
    %559 = vmatprep.subr.mxu0 0.0
    %560 = vmatpush1.msra.mxu0 0.0
    %561 = vmatprep.subr.mxu0 0.0
    %562 = vmatpush1.msra.mxu0 0.0
    %563 = vmatprep.subr.mxu0 0.0
    %564 = vmatpush1.msra.mxu0 0.0
    %565 = vmatprep.subr.mxu0 0.0
    %566 = vmatpush1.msra.mxu0 0.0
    %567 = vmatprep.subr.mxu0 0.0
    %568 = vmatpush1.msra.mxu0 0.0
    %569 = vmatprep.subr.mxu0 0.0
    %570 = vmatpush1.msra.mxu0 0.0
    %571 = vmatprep.subr.mxu0 0.0
    %572 = vmatpush1.msra.mxu0 0.0
    %573 = vmatprep.subr.mxu0 0.0
    %574 = vmatpush1.msra.mxu0 0.0
    %575 = vmatprep.subr.mxu0 0.0
    %576 = vmatpush1.msra.mxu0 0.0
    %577 = vmatprep.subr.mxu0 0.0
    %578 = vmatpush1.msra.mxu0 0.0
    %579 = vmatprep.subr.mxu0 0.0
    %580 = vmatpush1.msra.mxu0 0.0
    %581 = vmatprep.subr.mxu0 0.0
    %582 = vmatpush1.msra.mxu0 0.0
    %583 = vmatprep.subr.mxu0 0.0
    %584 = vmatpush1.msra.mxu0 0.0
    %585 = vmatprep.subr.mxu0 0.0
    %586 = vmatpush1.msra.mxu0 0.0
    %587 = vmatprep.subr.mxu0 0.0
    %588 = vmatpush1.msra.mxu0 0.0
    %589 = vmatprep.subr.mxu0 0.0
    %590 = vmatpush1.msra.mxu0 0.0
    %591 = vmatprep.subr.mxu0 0.0
    %592 = vmatpush1.msra.mxu0 0.0
    %593 = vmatprep.subr.mxu0 0.0
    %594 = vmatpush1.msra.mxu0 0.0
    %595 = vmatprep.subr.mxu0 0.0
    %596 = vmatpush1.msra.mxu0 0.0
    %597 = vmatprep.mubr.f32.mxu0 0.0
    %598 = vmatmul.mubr.f32.gmra.mrb[0].mxu0 %v531
    %v599 = vpop.f32.mrb[0].mxu0
    %v600 = vadd.f32 0.0, %v599
    %v601 = vpop.f32.mrb[0].mxu0
    %v602 = vadd.f32 0.0, %v601
    %603 = vdwg.mxu0
    %v606 = vcombine.low %v600, %v602
    %v608 = vunpack.c.l.s4 1983009808
    %v609 = vunpack.c.0.s8 %v608
    %v610 = vlaneseq
    %v611 = vshrl.u32 %v610, 7
    %v612 = vsub.s32 %v609, %v611
    %v613 = vrot.slane %v606, %v612
    %v615 = vadd.f32 %v529, %v613
    %v616 = vxor.u32 %v615, 2147483648
    %v617 = vmul.f32 %v616, 1.442695
    %v618 = vpow.pop %v617
    %v619 = vadd.f32 %v618, 1.0
    %v620 = vrcp.pop %v619
    %v621 = vmul.f32 1.0, %v620
    %623 = vrot.lane.b32.xlu0 %v615, 64
    %v624 = vpop.permute.xlu0 %623
    %v625 = vrot.slane %v624, 2
    %v627 = vtanh.pop %v625
    %v628 = vmul.f32 %v621, %v516
    %v629 = vmul.f32 %v621, %v627
    %631 = vrot.lane.b32.xlu0 %v629, 64
    %v632 = vpop.permute.xlu0 %631
    %v634 = vadd.f32 %v628, %v632
    %v635 = vtanh.pop %v634
    %v637 = vrot.slane %v621, 2
    %640 = vrot.lane.b32.xlu0 %v635, 64
    %v641 = vpop.permute.xlu0 %640
    %v643 = vmul.f32 %v637, %v641
    %s644 = scalar_lea.vmem [#allocation7], 8
    %645 = vst.msk [vmem:[%s644] sm:$0x3] %vm172, %v643
    %s646 = scalar_lea.vmem [#allocation2], 20
    %v647 = vld [vmem:[%s646] sm:$0xf]
    %v649 = vsel %vm57, %v643, 0
    %651 = vmatprep.subr.mxu0 %v41
    %652 = vmatpush1.msra.mxu0 %v40
    %653 = vmatprep.subr.mxu0 %v43
    %654 = vmatpush1.msra.mxu0 %v42
    %655 = vmatprep.subr.mxu0 %v45
    %656 = vmatpush1.msra.mxu0 %v44
    %657 = vmatprep.subr.mxu0 %v47
    %658 = vmatpush1.msra.mxu0 %v46
    %659 = vmatprep.subr.mxu0 %v49
    %660 = vmatpush1.msra.mxu0 %v48
    %661 = vmatprep.subr.mxu0 %v51
    %662 = vmatpush1.msra.mxu0 %v50
    %663 = vmatprep.subr.mxu0 %v53
    %664 = vmatpush1.msra.mxu0 %v52
    %665 = vmatprep.subr.mxu0 %v55
    %666 = vmatpush1.msra.mxu0 %v54
    %667 = vmatprep.subr.mxu0 0.0
    %668 = vmatpush1.msra.mxu0 0.0
    %669 = vmatprep.subr.mxu0 0.0
    %670 = vmatpush1.msra.mxu0 0.0
    %671 = vmatprep.subr.mxu0 0.0
    %672 = vmatpush1.msra.mxu0 0.0
    %673 = vmatprep.subr.mxu0 0.0
    %674 = vmatpush1.msra.mxu0 0.0
    %675 = vmatprep.subr.mxu0 0.0
    %676 = vmatpush1.msra.mxu0 0.0
    %677 = vmatprep.subr.mxu0 0.0
    %678 = vmatpush1.msra.mxu0 0.0
    %679 = vmatprep.subr.mxu0 0.0
    %680 = vmatpush1.msra.mxu0 0.0
    %681 = vmatprep.subr.mxu0 0.0
    %682 = vmatpush1.msra.mxu0 0.0
    %683 = vmatprep.subr.mxu0 0.0
    %684 = vmatpush1.msra.mxu0 0.0
    %685 = vmatprep.subr.mxu0 0.0
    %686 = vmatpush1.msra.mxu0 0.0
    %687 = vmatprep.subr.mxu0 0.0
    %688 = vmatpush1.msra.mxu0 0.0
    %689 = vmatprep.subr.mxu0 0.0
    %690 = vmatpush1.msra.mxu0 0.0
    %691 = vmatprep.subr.mxu0 0.0
    %692 = vmatpush1.msra.mxu0 0.0
    %693 = vmatprep.subr.mxu0 0.0
    %694 = vmatpush1.msra.mxu0 0.0
    %695 = vmatprep.subr.mxu0 0.0
    %696 = vmatpush1.msra.mxu0 0.0
    %697 = vmatprep.subr.mxu0 0.0
    %698 = vmatpush1.msra.mxu0 0.0
    %699 = vmatprep.subr.mxu0 0.0
    %700 = vmatpush1.msra.mxu0 0.0
    %701 = vmatprep.subr.mxu0 0.0
    %702 = vmatpush1.msra.mxu0 0.0
    %703 = vmatprep.subr.mxu0 0.0
    %704 = vmatpush1.msra.mxu0 0.0
    %705 = vmatprep.subr.mxu0 0.0
    %706 = vmatpush1.msra.mxu0 0.0
    %707 = vmatprep.subr.mxu0 0.0
    %708 = vmatpush1.msra.mxu0 0.0
    %709 = vmatprep.subr.mxu0 0.0
    %710 = vmatpush1.msra.mxu0 0.0
    %711 = vmatprep.subr.mxu0 0.0
    %712 = vmatpush1.msra.mxu0 0.0
    %713 = vmatprep.subr.mxu0 0.0
    %714 = vmatpush1.msra.mxu0 0.0
    %715 = vmatprep.mubr.f32.mxu0 0.0
    %716 = vmatmul.mubr.f32.gmra.mrb[0].mxu0 %v649
    %v717 = vpop.f32.mrb[0].mxu0
    %v718 = vadd.f32 0.0, %v717
    %v719 = vpop.f32.mrb[0].mxu0
    %v720 = vadd.f32 0.0, %v719
    %721 = vdwg.mxu0
    %v724 = vcombine.low %v718, %v720
    %v726 = vunpack.c.l.s4 1983009808
    %v727 = vunpack.c.0.s8 %v726
    %v728 = vlaneseq
    %v729 = vshrl.u32 %v728, 7
    %v730 = vsub.s32 %v727, %v729
    %v731 = vrot.slane %v724, %v730
    %v733 = vadd.f32 %v647, %v731
    %v734 = vxor.u32 %v733, 2147483648
    %v735 = vmul.f32 %v734, 1.442695
    %v736 = vpow.pop %v735
    %v737 = vadd.f32 %v736, 1.0
    %v738 = vrcp.pop %v737
    %v739 = vmul.f32 1.0, %v738
    %741 = vrot.lane.b32.xlu0 %v733, 64
    %v742 = vpop.permute.xlu0 %741
    %v743 = vrot.slane %v742, 2
    %v745 = vtanh.pop %v743
    %v746 = vmul.f32 %v739, %v634
    %v747 = vmul.f32 %v739, %v745
    %749 = vrot.lane.b32.xlu0 %v747, 64
    %v750 = vpop.permute.xlu0 %749
    %v752 = vadd.f32 %v746, %v750
    %v753 = vtanh.pop %v752
    %v755 = vrot.slane %v739, 2
    %758 = vrot.lane.b32.xlu0 %v753, 64
    %v759 = vpop.permute.xlu0 %758
    %v761 = vmul.f32 %v755, %v759
    %s762 = scalar_lea.vmem [#allocation7], 10
    %763 = vst.msk [vmem:[%s762] sm:$0x3] %vm172, %v761
    %s764 = scalar_lea.vmem [#allocation2], 24
    %v765 = vld [vmem:[%s764] sm:$0xf]
    %v767 = vsel %vm57, %v761, 0
    %769 = vmatprep.subr.mxu0 %v41
    %770 = vmatpush1.msra.mxu0 %v40
    %771 = vmatprep.subr.mxu0 %v43
    %772 = vmatpush1.msra.mxu0 %v42
    %773 = vmatprep.subr.mxu0 %v45
    %774 = vmatpush1.msra.mxu0 %v44
    %775 = vmatprep.subr.mxu0 %v47
    %776 = vmatpush1.msra.mxu0 %v46
    %777 = vmatprep.subr.mxu0 %v49
    %778 = vmatpush1.msra.mxu0 %v48
    %779 = vmatprep.subr.mxu0 %v51
    %780 = vmatpush1.msra.mxu0 %v50
    %781 = vmatprep.subr.mxu0 %v53
    %782 = vmatpush1.msra.mxu0 %v52
    %783 = vmatprep.subr.mxu0 %v55
    %784 = vmatpush1.msra.mxu0 %v54
    %785 = vmatprep.subr.mxu0 0.0
    %786 = vmatpush1.msra.mxu0 0.0
    %787 = vmatprep.subr.mxu0 0.0
    %788 = vmatpush1.msra.mxu0 0.0
    %789 = vmatprep.subr.mxu0 0.0
    %790 = vmatpush1.msra.mxu0 0.0
    %791 = vmatprep.subr.mxu0 0.0
    %792 = vmatpush1.msra.mxu0 0.0
    %793 = vmatprep.subr.mxu0 0.0
    %794 = vmatpush1.msra.mxu0 0.0
    %795 = vmatprep.subr.mxu0 0.0
    %796 = vmatpush1.msra.mxu0 0.0
    %797 = vmatprep.subr.mxu0 0.0
    %798 = vmatpush1.msra.mxu0 0.0
    %799 = vmatprep.subr.mxu0 0.0
    %800 = vmatpush1.msra.mxu0 0.0
    %801 = vmatprep.subr.mxu0 0.0
    %802 = vmatpush1.msra.mxu0 0.0
    %803 = vmatprep.subr.mxu0 0.0
    %804 = vmatpush1.msra.mxu0 0.0
    %805 = vmatprep.subr.mxu0 0.0
    %806 = vmatpush1.msra.mxu0 0.0
    %807 = vmatprep.subr.mxu0 0.0
    %808 = vmatpush1.msra.mxu0 0.0
    %809 = vmatprep.subr.mxu0 0.0
    %810 = vmatpush1.msra.mxu0 0.0
    %811 = vmatprep.subr.mxu0 0.0
    %812 = vmatpush1.msra.mxu0 0.0
    %813 = vmatprep.subr.mxu0 0.0
    %814 = vmatpush1.msra.mxu0 0.0
    %815 = vmatprep.subr.mxu0 0.0
    %816 = vmatpush1.msra.mxu0 0.0
    %817 = vmatprep.subr.mxu0 0.0
    %818 = vmatpush1.msra.mxu0 0.0
    %819 = vmatprep.subr.mxu0 0.0
    %820 = vmatpush1.msra.mxu0 0.0
    %821 = vmatprep.subr.mxu0 0.0
    %822 = vmatpush1.msra.mxu0 0.0
    %823 = vmatprep.subr.mxu0 0.0
    %824 = vmatpush1.msra.mxu0 0.0
    %825 = vmatprep.subr.mxu0 0.0
    %826 = vmatpush1.msra.mxu0 0.0
    %827 = vmatprep.subr.mxu0 0.0
    %828 = vmatpush1.msra.mxu0 0.0
    %829 = vmatprep.subr.mxu0 0.0
    %830 = vmatpush1.msra.mxu0 0.0
    %831 = vmatprep.subr.mxu0 0.0
    %832 = vmatpush1.msra.mxu0 0.0
    %833 = vmatprep.mubr.f32.mxu0 0.0
    %834 = vmatmul.mubr.f32.gmra.mrb[0].mxu0 %v767
    %v835 = vpop.f32.mrb[0].mxu0
    %v836 = vadd.f32 0.0, %v835
    %v837 = vpop.f32.mrb[0].mxu0
    %v838 = vadd.f32 0.0, %v837
    %839 = vdwg.mxu0
    %v842 = vcombine.low %v836, %v838
    %v844 = vunpack.c.l.s4 1983009808
    %v845 = vunpack.c.0.s8 %v844
    %v846 = vlaneseq
    %v847 = vshrl.u32 %v846, 7
    %v848 = vsub.s32 %v845, %v847
    %v849 = vrot.slane %v842, %v848
    %v851 = vadd.f32 %v765, %v849
    %v852 = vxor.u32 %v851, 2147483648
    %v853 = vmul.f32 %v852, 1.442695
    %v854 = vpow.pop %v853
    %v855 = vadd.f32 %v854, 1.0
    %v856 = vrcp.pop %v855
    %v857 = vmul.f32 1.0, %v856
    %859 = vrot.lane.b32.xlu0 %v851, 64
    %v860 = vpop.permute.xlu0 %859
    %v861 = vrot.slane %v860, 2
    %v863 = vtanh.pop %v861
    %v864 = vmul.f32 %v857, %v752
    %v865 = vmul.f32 %v857, %v863
    %867 = vrot.lane.b32.xlu0 %v865, 64
    %v868 = vpop.permute.xlu0 %867
    %v870 = vadd.f32 %v864, %v868
    %v871 = vtanh.pop %v870
    %v873 = vrot.slane %v857, 2
    %876 = vrot.lane.b32.xlu0 %v871, 64
    %v877 = vpop.permute.xlu0 %876
    %v879 = vmul.f32 %v873, %v877
    %s880 = scalar_lea.vmem [#allocation7], 12
    %881 = vst.msk [vmem:[%s880] sm:$0x3] %vm172, %v879
    %s882 = scalar_lea.vmem [#allocation2], 28
    %v883 = vld [vmem:[%s882] sm:$0xf]
    %v885 = vsel %vm57, %v879, 0
    %887 = vmatprep.subr.mxu0 %v41
    %888 = vmatpush1.msra.mxu0 %v40
    %889 = vmatprep.subr.mxu0 %v43
    %890 = vmatpush1.msra.mxu0 %v42
    %891 = vmatprep.subr.mxu0 %v45
    %892 = vmatpush1.msra.mxu0 %v44
    %893 = vmatprep.subr.mxu0 %v47
    %894 = vmatpush1.msra.mxu0 %v46
    %895 = vmatprep.subr.mxu0 %v49
    %896 = vmatpush1.msra.mxu0 %v48
    %897 = vmatprep.subr.mxu0 %v51
    %898 = vmatpush1.msra.mxu0 %v50
    %899 = vmatprep.subr.mxu0 %v53
    %900 = vmatpush1.msra.mxu0 %v52
    %901 = vmatprep.subr.mxu0 %v55
    %902 = vmatpush1.msra.mxu0 %v54
    %903 = vmatprep.subr.mxu0 0.0
    %904 = vmatpush1.msra.mxu0 0.0
    %905 = vmatprep.subr.mxu0 0.0
    %906 = vmatpush1.msra.mxu0 0.0
    %907 = vmatprep.subr.mxu0 0.0
    %908 = vmatpush1.msra.mxu0 0.0
    %909 = vmatprep.subr.mxu0 0.0
    %910 = vmatpush1.msra.mxu0 0.0
    %911 = vmatprep.subr.mxu0 0.0
    %912 = vmatpush1.msra.mxu0 0.0
    %913 = vmatprep.subr.mxu0 0.0
    %914 = vmatpush1.msra.mxu0 0.0
    %915 = vmatprep.subr.mxu0 0.0
    %916 = vmatpush1.msra.mxu0 0.0
    %917 = vmatprep.subr.mxu0 0.0
    %918 = vmatpush1.msra.mxu0 0.0
    %919 = vmatprep.subr.mxu0 0.0
    %920 = vmatpush1.msra.mxu0 0.0
    %921 = vmatprep.subr.mxu0 0.0
    %922 = vmatpush1.msra.mxu0 0.0
    %923 = vmatprep.subr.mxu0 0.0
    %924 = vmatpush1.msra.mxu0 0.0
    %925 = vmatprep.subr.mxu0 0.0
    %926 = vmatpush1.msra.mxu0 0.0
    %927 = vmatprep.subr.mxu0 0.0
    %928 = vmatpush1.msra.mxu0 0.0
    %929 = vmatprep.subr.mxu0 0.0
    %930 = vmatpush1.msra.mxu0 0.0
    %931 = vmatprep.subr.mxu0 0.0
    %932 = vmatpush1.msra.mxu0 0.0
    %933 = vmatprep.subr.mxu0 0.0
    %934 = vmatpush1.msra.mxu0 0.0
    %935 = vmatprep.subr.mxu0 0.0
    %936 = vmatpush1.msra.mxu0 0.0
    %937 = vmatprep.subr.mxu0 0.0
    %938 = vmatpush1.msra.mxu0 0.0
    %939 = vmatprep.subr.mxu0 0.0
    %940 = vmatpush1.msra.mxu0 0.0
    %941 = vmatprep.subr.mxu0 0.0
    %942 = vmatpush1.msra.mxu0 0.0
    %943 = vmatprep.subr.mxu0 0.0
    %944 = vmatpush1.msra.mxu0 0.0
    %945 = vmatprep.subr.mxu0 0.0
    %946 = vmatpush1.msra.mxu0 0.0
    %947 = vmatprep.subr.mxu0 0.0
    %948 = vmatpush1.msra.mxu0 0.0
    %949 = vmatprep.subr.mxu0 0.0
    %950 = vmatpush1.msra.mxu0 0.0
    %951 = vmatprep.mubr.f32.mxu0 0.0
    %952 = vmatmul.mubr.f32.gmra.mrb[0].mxu0 %v885
    %v953 = vpop.f32.mrb[0].mxu0
    %v954 = vadd.f32 0.0, %v953
    %v955 = vpop.f32.mrb[0].mxu0
    %v956 = vadd.f32 0.0, %v955
    %957 = vdwg.mxu0
    %v960 = vcombine.low %v954, %v956
    %v962 = vunpack.c.l.s4 1983009808
    %v963 = vunpack.c.0.s8 %v962
    %v964 = vlaneseq
    %v965 = vshrl.u32 %v964, 7
    %v966 = vsub.s32 %v963, %v965
    %v967 = vrot.slane %v960, %v966
    %v969 = vadd.f32 %v883, %v967
    %v970 = vxor.u32 %v969, 2147483648
    %v971 = vmul.f32 %v970, 1.442695
    %v972 = vpow.pop %v971
    %v973 = vadd.f32 %v972, 1.0
    %v974 = vrcp.pop %v973
    %v975 = vmul.f32 1.0, %v974
    %977 = vrot.lane.b32.xlu0 %v969, 64
    %v978 = vpop.permute.xlu0 %977
    %v979 = vrot.slane %v978, 2
    %v981 = vtanh.pop %v979
    %v982 = vmul.f32 %v975, %v870
    %v983 = vmul.f32 %v975, %v981
    %985 = vrot.lane.b32.xlu0 %v983, 64
    %v986 = vpop.permute.xlu0 %985
    %v988 = vadd.f32 %v982, %v986
    %v989 = vtanh.pop %v988
    %v991 = vrot.slane %v975, 2
    %994 = vrot.lane.b32.xlu0 %v989, 64
    %v995 = vpop.permute.xlu0 %994
    %v997 = vmul.f32 %v991, %v995
    %s998 = scalar_lea.vmem [#allocation7], 14
    %999 = vst.msk [vmem:[%s998] sm:$0x3] %vm172, %v997
    // Predicated region
    $region18: #{sequence_decoder_forward.1} parent=1 // pred_check
      _
    $region19: #{sequence_decoder_forward.1} parent=1 // pred_check_branch
      %1001 = sbr.rel (0) target = $region21
    $region20: #{sequence_decoder_forward.1} parent=1 // pred_region
      %s1003 = ssub.s32 256, 256
      %1004 = vsyncadd [#allocation4], %s1003
      %s1005 = sshll.u32 [#allocation7], 4
      %s1006 = int_to_ptr.vmem [resolvable:$true] %s1005
      %1011 = dma.vmem_to_hbm [thread:$0]  %s1006, 256, %s2, [#allocation4], 32, 32, 2
    $region21: #{sequence_decoder_forward.1} parent=1 // pred_fallthru
      _
    // Predicated region
    $region22: #{sequence_decoder_forward.1} parent=1 // pred_check
      _
    $region23: #{sequence_decoder_forward.1} parent=1 // pred_check_branch
      %1013 = sbr.rel (0) target = $region25
    $region24: #{sequence_decoder_forward.1} parent=1 // pred_region
      %1014 = dma.done [#allocation4], 256
    $region25: #{sequence_decoder_forward.1} parent=1 // pred_fallthru
      _
    %1015 = vsyncpa [#allocation3], 1
    %1016 = vsyncpa [#allocation6], 1
    %1017 = vsyncpa [#allocation4], 1

</llo_original>
